<compile_context>
chip_gen: v6e
topology: v6e:2x2x1
jax: 0.10.0
libtpu: 0.0.40
codegen_flags: <defaults>
</compile_context>

<pallas_src>
import math

import jax
import jax.numpy as jnp
from jax.experimental import pallas as pl
from jax.experimental.pallas import tpu as pltpu


def _round_up(x, m):
    return ((x + m - 1) // m) * m


# ----------------------------------------------------------------------------
# Pallas kernel: one batch tile of the full forward pass
#   (matmul + bias + swish) x 2, then matmul + bias
# ----------------------------------------------------------------------------
def message_decoder_kernel(z_ref, w1_ref, b1_ref, w2_ref, b2_ref, w3_ref, b3_ref,
                           out_ref):
    # layer 1: Linear(n_latents -> hidden) + Swish
    h = jnp.dot(z_ref[...], w1_ref[...], preferred_element_type=jnp.float32)
    h = h + b1_ref[...]                       # bias is (1, H) -> broadcasts over batch
    h = h * jax.nn.sigmoid(h)                 # Swish / SiLU in f32 (EUP + VPU)

    # layer 2: Linear(hidden -> hidden) + Swish
    h = jnp.dot(h.astype(w2_ref.dtype), w2_ref[...],
                preferred_element_type=jnp.float32)
    h = h + b2_ref[...]
    h = h * jax.nn.sigmoid(h)

    # layer 3: Linear(hidden -> num_embeddings), no activation
    o = jnp.dot(h.astype(w3_ref.dtype), w3_ref[...],
                preferred_element_type=jnp.float32)
    o = o + b3_ref[...]
    out_ref[...] = o.astype(out_ref.dtype)


# ----------------------------------------------------------------------------
# Wrapper: pad to lane-dense shapes, tile the batch, call the kernel
# ----------------------------------------------------------------------------
def message_decoder(z, params, *, compute_dtype=jnp.bfloat16,
                    block_batch=512, out_dtype=jnp.float32):
    """z: (B, n_latents) float32. params: dict of w1,b1,w2,b2,w3,b3 (f32)."""
    B, K = z.shape
    H = params["w1"].shape[1]
    N = params["w3"].shape[1]

    # Lane-dense / MXU-friendly padded feature dims.
    Kp = _round_up(K, 128)
    Hp = _round_up(H, 128)
    Np = _round_up(N, 128)

    # Batch tile: big tiles amortize per-step overhead; small batches -> 1 tile.
    TB = block_batch if B >= block_batch else _round_up(B, 8)
    Bp = _round_up(B, TB)

    def pad2(a, rows, cols):
        return jnp.pad(a, ((0, rows - a.shape[0]), (0, cols - a.shape[1])))

    # bf16 MXU inputs; f32 biases (added to the f32 accumulator).
    zp = pad2(z, Bp, Kp).astype(compute_dtype)
    w1 = pad2(params["w1"], Kp, Hp).astype(compute_dtype)
    w2 = pad2(params["w2"], Hp, Hp).astype(compute_dtype)
    w3 = pad2(params["w3"], Hp, Np).astype(compute_dtype)
    b1 = pad2(params["b1"], 1, Hp).astype(jnp.float32)
    b2 = pad2(params["b2"], 1, Hp).astype(jnp.float32)
    b3 = pad2(params["b3"], 1, Np).astype(jnp.float32)

    grid = (Bp // TB,)

    def const_spec(shape):
        # Weights/biases: same block every grid step -> stay resident in VMEM.
        return pl.BlockSpec(shape, lambda i: (0, 0))

    out = pl.pallas_call(
        message_decoder_kernel,
        out_shape=jax.ShapeDtypeStruct((Bp, Np), out_dtype),
        grid=grid,
        in_specs=[
            pl.BlockSpec((TB, Kp), lambda i: (i, 0)),   # z: blocked along batch
            const_spec((Kp, Hp)), const_spec((1, Hp)),  # w1, b1
            const_spec((Hp, Hp)), const_spec((1, Hp)),  # w2, b2
            const_spec((Hp, Np)), const_spec((1, Np)),  # w3, b3
        ],
        out_specs=pl.BlockSpec((TB, Np), lambda i: (i, 0)),
        compiler_params=pltpu.CompilerParams(
            dimension_semantics=("parallel",)),
        # TODO(synk): for very large hidden/num_embeddings (w3 > VMEM), also
        # tile the output-N dimension with w3 blocked along N.
    )(zp, w1, b1, w2, b2, w3, b3)

    return out[:B, :N]


# ----------------------------------------------------------------------------
# Deterministic parameter init (mirrors nn.Linear + xavier_uniform_ on weights)
# ----------------------------------------------------------------------------
def xavier_uniform(key, fan_in, fan_out):
    limit = math.sqrt(6.0 / (fan_in + fan_out))
    # stored as (in, out) so the kernel does x @ W
    return jax.random.uniform(key, (fan_in, fan_out), jnp.float32, -limit, limit)


def linear_bias(key, fan_in, fan_out):
    # PyTorch default bias init: U(-1/sqrt(fan_in), 1/sqrt(fan_in)); kept 2D (1, out)
    bound = 1.0 / math.sqrt(fan_in)
    return jax.random.uniform(key, (1, fan_out), jnp.float32, -bound, bound)


def init_params(key, n_latents, num_embeddings, hidden_dim):
    k = jax.random.split(key, 6)
    return {
        "w1": xavier_uniform(k[0], n_latents, hidden_dim),
        "b1": linear_bias(k[1], n_latents, hidden_dim),
        "w2": xavier_uniform(k[2], hidden_dim, hidden_dim),
        "b2": linear_bias(k[3], hidden_dim, hidden_dim),
        "w3": xavier_uniform(k[4], hidden_dim, num_embeddings),
        "b3": linear_bias(k[5], hidden_dim, num_embeddings),
    }


# Pure-JAX references for correctness checks
def reference_f32(z, p):
    h = z @ p["w1"] + p["b1"]
    h = h * jax.nn.sigmoid(h)
    h = h @ p["w2"] + p["b2"]
    h = h * jax.nn.sigmoid(h)
    return h @ p["w3"] + p["b3"]


def reference_mixed(z, p, compute_dtype=jnp.bfloat16):
    """Same bf16-input / f32-accumulate recipe as the kernel."""
    c = compute_dtype
    h = jnp.dot(z.astype(c), p["w1"].astype(c),
                preferred_element_type=jnp.float32) + p["b1"]
    h = h * jax.nn.sigmoid(h)
    h = jnp.dot(h.astype(c), p["w2"].astype(c),
                preferred_element_type=jnp.float32) + p["b2"]
    h = h * jax.nn.sigmoid(h)
    return jnp.dot(h.astype(c), p["w3"].astype(c),
                   preferred_element_type=jnp.float32) + p["b3"]


if __name__ == "__main__":
    n_latents, num_embeddings, hidden_dim = 16, 10, 32
    batch = 8

    key = jax.random.PRNGKey(0)
    k_params, k_z = jax.random.split(key)
    params = init_params(k_params, n_latents, num_embeddings, hidden_dim)
    z = jax.random.normal(k_z, (batch, n_latents), jnp.float32)

    out = message_decoder(z, params)
    out = jax.block_until_ready(out)
    assert out.shape == (batch, num_embeddings)

    # Tight check against a reference that uses the identical bf16-input /
    # f32-accumulate recipe, plus a loose sanity check vs the pure-f32 math.
    ref_mixed = reference_mixed(z, params)
    ref_f32 = reference_f32(z, params)
    assert jnp.allclose(out, ref_mixed, atol=1e-3, rtol=1e-3), "mismatch vs mixed-precision reference"
    assert jnp.allclose(out, ref_f32, atol=5e-2, rtol=5e-2), "mismatch vs f32 reference"

    print("KERNEL_OK")
</pallas_src>

<mosaic_0001>
module attributes {stable_mosaic.version = 11 : i64} {
  func.func @message_decoder_kernel(%arg0: i32, %arg1: memref<8x128xbf16, #tpu.memory_space<vmem>>, %arg2: memref<128x128xbf16, #tpu.memory_space<vmem>>, %arg3: memref<1x128xf32, #tpu.memory_space<vmem>>, %arg4: memref<128x128xbf16, #tpu.memory_space<vmem>>, %arg5: memref<1x128xf32, #tpu.memory_space<vmem>>, %arg6: memref<128x128xbf16, #tpu.memory_space<vmem>>, %arg7: memref<1x128xf32, #tpu.memory_space<vmem>>, %arg8: memref<8x128xf32, #tpu.memory_space<vmem>>) attributes {dimension_semantics = [#tpu.dimension_semantics<parallel>], iteration_bounds = array<i64: 1>, scalar_prefetch = 0 : i64, scratch_operands = 0 : i64, tpu.core_type = #tpu.core_type<tc>, window_params = [{transform_indices = @transform_0, window_bounds = array<i64: 8, 128>}, {pipeline_mode = #tpu.pipeline_mode<synchronous>, transform_indices = @transform_1, window_bounds = array<i64: 128, 128>}, {pipeline_mode = #tpu.pipeline_mode<synchronous>, transform_indices = @transform_2, window_bounds = array<i64: 1, 128>}, {pipeline_mode = #tpu.pipeline_mode<synchronous>, transform_indices = @transform_3, window_bounds = array<i64: 128, 128>}, {pipeline_mode = #tpu.pipeline_mode<synchronous>, transform_indices = @transform_4, window_bounds = array<i64: 1, 128>}, {pipeline_mode = #tpu.pipeline_mode<synchronous>, transform_indices = @transform_5, window_bounds = array<i64: 128, 128>}, {pipeline_mode = #tpu.pipeline_mode<synchronous>, transform_indices = @transform_6, window_bounds = array<i64: 1, 128>}, {transform_indices = @transform_7, window_bounds = array<i64: 8, 128>}]} {
    %c0 = arith.constant 0 : index
    %c0_0 = arith.constant 0 : index
    %0 = vector.load %arg1[%c0, %c0_0] : memref<8x128xbf16, #tpu.memory_space<vmem>>, vector<8x128xbf16>
    %c0_1 = arith.constant 0 : index
    %c0_2 = arith.constant 0 : index
    %1 = vector.load %arg2[%c0_1, %c0_2] : memref<128x128xbf16, #tpu.memory_space<vmem>>, vector<128x128xbf16>
    %cst = arith.constant dense<0.000000e+00> : vector<8x128xf32>
    %2 = tpu.matmul %0, %1, %cst {dimension_numbers = #tpu.dot_dimension_numbers<[1], [0], [0], [1], [0, 0, 1, 1], [], []>} : vector<8x128xbf16>, vector<128x128xbf16>, vector<8x128xf32> -> vector<8x128xf32>
    %c0_3 = arith.constant 0 : index
    %c0_4 = arith.constant 0 : index
    %3 = vector.load %arg3[%c0_3, %c0_4] : memref<1x128xf32, #tpu.memory_space<vmem>>, vector<1x128xf32>
    %4 = vector.broadcast %3 : vector<1x128xf32> to vector<8x128xf32>
    %5 = arith.addf %2, %4 : vector<8x128xf32>
    %6 = arith.negf %5 : vector<8x128xf32>
    %7 = math.exp %6 : vector<8x128xf32>
    %cst_5 = arith.constant 1.000000e+00 : f32
    %8 = vector.broadcast %cst_5 : f32 to vector<8x128xf32>
    %9 = arith.addf %8, %7 : vector<8x128xf32>
    %10 = arith.divf %8, %9 : vector<8x128xf32>
    %11 = arith.mulf %5, %10 : vector<8x128xf32>
    %12 = arith.truncf %11 : vector<8x128xf32> to vector<8x128xbf16>
    %c0_6 = arith.constant 0 : index
    %c0_7 = arith.constant 0 : index
    %13 = vector.load %arg4[%c0_6, %c0_7] : memref<128x128xbf16, #tpu.memory_space<vmem>>, vector<128x128xbf16>
    %cst_8 = arith.constant dense<0.000000e+00> : vector<8x128xf32>
    %14 = tpu.matmul %12, %13, %cst_8 {dimension_numbers = #tpu.dot_dimension_numbers<[1], [0], [0], [1], [0, 0, 1, 1], [], []>} : vector<8x128xbf16>, vector<128x128xbf16>, vector<8x128xf32> -> vector<8x128xf32>
    %c0_9 = arith.constant 0 : index
    %c0_10 = arith.constant 0 : index
    %15 = vector.load %arg5[%c0_9, %c0_10] : memref<1x128xf32, #tpu.memory_space<vmem>>, vector<1x128xf32>
    %16 = vector.broadcast %15 : vector<1x128xf32> to vector<8x128xf32>
    %17 = arith.addf %14, %16 : vector<8x128xf32>
    %18 = arith.negf %17 : vector<8x128xf32>
    %19 = math.exp %18 : vector<8x128xf32>
    %cst_11 = arith.constant 1.000000e+00 : f32
    %20 = vector.broadcast %cst_11 : f32 to vector<8x128xf32>
    %21 = arith.addf %20, %19 : vector<8x128xf32>
    %22 = arith.divf %20, %21 : vector<8x128xf32>
    %23 = arith.mulf %17, %22 : vector<8x128xf32>
    %24 = arith.truncf %23 : vector<8x128xf32> to vector<8x128xbf16>
    %c0_12 = arith.constant 0 : index
    %c0_13 = arith.constant 0 : index
    %25 = vector.load %arg6[%c0_12, %c0_13] : memref<128x128xbf16, #tpu.memory_space<vmem>>, vector<128x128xbf16>
    %cst_14 = arith.constant dense<0.000000e+00> : vector<8x128xf32>
    %26 = tpu.matmul %24, %25, %cst_14 {dimension_numbers = #tpu.dot_dimension_numbers<[1], [0], [0], [1], [0, 0, 1, 1], [], []>} : vector<8x128xbf16>, vector<128x128xbf16>, vector<8x128xf32> -> vector<8x128xf32>
    %c0_15 = arith.constant 0 : index
    %c0_16 = arith.constant 0 : index
    %27 = vector.load %arg7[%c0_15, %c0_16] : memref<1x128xf32, #tpu.memory_space<vmem>>, vector<1x128xf32>
    %28 = vector.broadcast %27 : vector<1x128xf32> to vector<8x128xf32>
    %29 = arith.addf %26, %28 : vector<8x128xf32>
    %c0_17 = arith.constant 0 : index
    %c0_18 = arith.constant 0 : index
    %30 = vector.load %arg8[%c0_17, %c0_18] : memref<8x128xf32, #tpu.memory_space<vmem>>, vector<8x128xf32>
    tpu.vector_store %arg8[%c0_17, %c0_18], %29 {strides = array<i32>} : memref<8x128xf32, #tpu.memory_space<vmem>>, vector<8x128xf32>,
    return
  }
  func.func @transform_0(%arg0: i32) -> (i32, i32) {
    %c0_i32 = arith.constant 0 : i32
    %c0_i32_0 = arith.constant 0 : i32
    return %arg0, %c0_i32 : i32, i32
  }
  func.func @transform_1(%arg0: i32) -> (i32, i32) {
    %c0_i32 = arith.constant 0 : i32
    %c0_i32_0 = arith.constant 0 : i32
    %c0_i32_1 = arith.constant 0 : i32
    return %c0_i32, %c0_i32_0 : i32, i32
  }
  func.func @transform_2(%arg0: i32) -> (i32, i32) {
    %c0_i32 = arith.constant 0 : i32
    %c0_i32_0 = arith.constant 0 : i32
    %c0_i32_1 = arith.constant 0 : i32
    return %c0_i32, %c0_i32_0 : i32, i32
  }
  func.func @transform_3(%arg0: i32) -> (i32, i32) {
    %c0_i32 = arith.constant 0 : i32
    %c0_i32_0 = arith.constant 0 : i32
    %c0_i32_1 = arith.constant 0 : i32
    return %c0_i32, %c0_i32_0 : i32, i32
  }
  func.func @transform_4(%arg0: i32) -> (i32, i32) {
    %c0_i32 = arith.constant 0 : i32
    %c0_i32_0 = arith.constant 0 : i32
    %c0_i32_1 = arith.constant 0 : i32
    return %c0_i32, %c0_i32_0 : i32, i32
  }
  func.func @transform_5(%arg0: i32) -> (i32, i32) {
    %c0_i32 = arith.constant 0 : i32
    %c0_i32_0 = arith.constant 0 : i32
    %c0_i32_1 = arith.constant 0 : i32
    return %c0_i32, %c0_i32_0 : i32, i32
  }
  func.func @transform_6(%arg0: i32) -> (i32, i32) {
    %c0_i32 = arith.constant 0 : i32
    %c0_i32_0 = arith.constant 0 : i32
    %c0_i32_1 = arith.constant 0 : i32
    return %c0_i32, %c0_i32_0 : i32, i32
  }
  func.func @transform_7(%arg0: i32) -> (i32, i32) {
    %c0_i32 = arith.constant 0 : i32
    %c0_i32_0 = arith.constant 0 : i32
    return %arg0, %c0_i32 : i32, i32
  }
}

</mosaic_0001>

<llo_original>
// kernel: tpu_custom_call.1
$region0: #{tpu_custom_call.1}
  #allocation0 [shape = 'u32[]', space=smem, size = 0x4, offset = 0x4, fixed_abs, tag = 'smem constant byte address 0x4 - core index']
  #allocation1 [shape = 'u32[144,128]{1,0:T(1,128)}', space=vmem, size = 0x12000, scoped, tag = 'internal scratch']
  %s0 = inlined_call_operand.hbm [shape: bf16[8,128], index: 0, kind: input, shape index: {}]
  %s1 = inlined_call_operand.hbm [shape: bf16[128,128], index: 1, kind: input, shape index: {}]
  %s2 = inlined_call_operand.vmem [shape: f32[1,128], index: 2, kind: input, shape index: {}]
  %s3 = inlined_call_operand.hbm [shape: bf16[128,128], index: 3, kind: input, shape index: {}]
  %s4 = inlined_call_operand.vmem [shape: f32[1,128], index: 4, kind: input, shape index: {}]
  %s5 = inlined_call_operand.hbm [shape: bf16[128,128], index: 5, kind: input, shape index: {}]
  %s6 = inlined_call_operand.vmem [shape: f32[1,128], index: 6, kind: input, shape index: {}]
  %s7 = inlined_call_operand.hbm [shape: f32[8,128], index: 7, kind: output, shape index: {}]
  %s8 = sld [smem:[#allocation0]]
  $region54: #{tpu_custom_call.1} parent=0
    _
  %s10 = ssub.s32 1, %s8
  %s11 = scalar_select 0, %s10, %s8
  $region1: #{tpu_custom_call.1} parent=0
    #allocation2 [shape = 'u8[2048]{0}', space=vmem, size = 0x800, scoped, tag = 'input window, operand 0, single buffered']
    #allocation3 [shape = 's32[1]{0}', space=sflag, size = 0x4, scoped, tag = 'scoped memory for tpu_custom_call.1']
    #allocation4 [shape = 's32[1]{0}', space=sflag, size = 0x4, scoped, tag = 'scoped memory for tpu_custom_call.1']
    #allocation5 [shape = 'u8[32768]{0}', space=vmem, size = 0x8000, scoped, tag = 'input window, operand 1, single buffered']
    #allocation6 [shape = 's32[1]{0}', space=sflag, size = 0x4, scoped, tag = 'scoped memory for tpu_custom_call.1']
    #allocation7 [shape = 'u8[32768]{0}', space=vmem, size = 0x8000, scoped, tag = 'input window, operand 3, single buffered']
    #allocation8 [shape = 'u8[32768]{0}', space=vmem, size = 0x8000, scoped, tag = 'input window, operand 5, single buffered']
    #allocation9 [shape = 's32[1]{0}', space=sflag, size = 0x4, scoped, tag = 'scoped memory for tpu_custom_call.1']
    #allocation10 [shape = 'u8[4096]{0}', space=vmem, size = 0x1000, scoped, tag = 'output window, operand 0, single buffered']
    %12 = vsyncpa [#allocation3], 0
    %13 = vsyncpa [#allocation6], 0
    %14 = vsyncpa [#allocation9], 0
    %15 = vsyncpa [#allocation4], 0
    // Predicated region
    $region2: #{tpu_custom_call.1} parent=1 // pred_check
      _
    $region3: #{tpu_custom_call.1} parent=1 // pred_check_branch
      %17 = sbr.rel (0) target = $region5
    $region4: #{tpu_custom_call.1} parent=1 // pred_region
      %s19 = ssub.s32 64, 64
      %20 = vsyncadd [#allocation3], %s19
      %s22 = sshll.u32 [#allocation2], 4
      %s23 = int_to_ptr.vmem [resolvable:$true] %s22
      %25 = dma.hbm_to_vmem [thread:$0]  %s0, 64, %s23, [#allocation3]
    $region5: #{tpu_custom_call.1} parent=1 // pred_fallthru
      _
    // Predicated region
    $region6: #{tpu_custom_call.1} parent=1 // pred_check
      _
    $region7: #{tpu_custom_call.1} parent=1 // pred_check_branch
      %27 = sbr.rel (0) target = $region9
    $region8: #{tpu_custom_call.1} parent=1 // pred_region
      %s29 = ssub.s32 1024, 1024
      %30 = vsyncadd [#allocation6], %s29
      %s31 = sshll.u32 [#allocation5], 4
      %s32 = int_to_ptr.vmem [resolvable:$true] %s31
      %37 = dma.hbm_to_vmem [thread:$0]  %s1, 1024, %s32, [#allocation6], 64, 64, 4
    $region9: #{tpu_custom_call.1} parent=1 // pred_fallthru
      _
    // Predicated region
    $region10: #{tpu_custom_call.1} parent=1 // pred_check
      _
    $region11: #{tpu_custom_call.1} parent=1 // pred_check_branch
      %39 = sbr.rel (0) target = $region13
    $region12: #{tpu_custom_call.1} parent=1 // pred_region
      _
    $region13: #{tpu_custom_call.1} parent=1 // pred_fallthru
      _
    // Predicated region
    $region14: #{tpu_custom_call.1} parent=1 // pred_check
      _
    $region15: #{tpu_custom_call.1} parent=1 // pred_check_branch
      %41 = sbr.rel (0) target = $region17
    $region16: #{tpu_custom_call.1} parent=1 // pred_region
      %s43 = ssub.s32 1024, 1024
      %44 = vsyncadd [#allocation6], %s43
      %s45 = sshll.u32 [#allocation7], 4
      %s46 = int_to_ptr.vmem [resolvable:$true] %s45
      %51 = dma.hbm_to_vmem [thread:$0]  %s3, 1024, %s46, [#allocation6], 64, 64, 4
    $region17: #{tpu_custom_call.1} parent=1 // pred_fallthru
      _
    // Predicated region
    $region18: #{tpu_custom_call.1} parent=1 // pred_check
      _
    $region19: #{tpu_custom_call.1} parent=1 // pred_check_branch
      %53 = sbr.rel (0) target = $region21
    $region20: #{tpu_custom_call.1} parent=1 // pred_region
      _
    $region21: #{tpu_custom_call.1} parent=1 // pred_fallthru
      _
    // Predicated region
    $region22: #{tpu_custom_call.1} parent=1 // pred_check
      _
    $region23: #{tpu_custom_call.1} parent=1 // pred_check_branch
      %55 = sbr.rel (0) target = $region25
    $region24: #{tpu_custom_call.1} parent=1 // pred_region
      %s57 = ssub.s32 1024, 1024
      %58 = vsyncadd [#allocation9], %s57
      %s59 = sshll.u32 [#allocation8], 4
      %s60 = int_to_ptr.vmem [resolvable:$true] %s59
      %65 = dma.hbm_to_vmem [thread:$0]  %s5, 1024, %s60, [#allocation9], 64, 64, 4
    $region25: #{tpu_custom_call.1} parent=1 // pred_fallthru
      _
    // Predicated region
    $region26: #{tpu_custom_call.1} parent=1 // pred_check
      _
    $region27: #{tpu_custom_call.1} parent=1 // pred_check_branch
      %67 = sbr.rel (0) target = $region29
    $region28: #{tpu_custom_call.1} parent=1 // pred_region
      _
    $region29: #{tpu_custom_call.1} parent=1 // pred_fallthru
      _
    // Predicated region
    $region30: #{tpu_custom_call.1} parent=1 // pred_check
      _
    $region31: #{tpu_custom_call.1} parent=1 // pred_check_branch
      %69 = sbr.rel (0) target = $region33
    $region32: #{tpu_custom_call.1} parent=1 // pred_region
      %70 = dma.done [#allocation3], 64
    $region33: #{tpu_custom_call.1} parent=1 // pred_fallthru
      _
    // Predicated region
    $region34: #{tpu_custom_call.1} parent=1 // pred_check
      _
    $region35: #{tpu_custom_call.1} parent=1 // pred_check_branch
      %72 = sbr.rel (0) target = $region37
    $region36: #{tpu_custom_call.1} parent=1 // pred_region
      %73 = dma.done [#allocation6], 1024
    $region37: #{tpu_custom_call.1} parent=1 // pred_fallthru
      _
    // Predicated region
    $region38: #{tpu_custom_call.1} parent=1 // pred_check
      _
    $region39: #{tpu_custom_call.1} parent=1 // pred_check_branch
      %75 = sbr.rel (0) target = $region41
    $region40: #{tpu_custom_call.1} parent=1 // pred_region
      %76 = dma.done [#allocation6], 1024
    $region41: #{tpu_custom_call.1} parent=1 // pred_fallthru
      _
    // Predicated region
    $region42: #{tpu_custom_call.1} parent=1 // pred_check
      _
    $region43: #{tpu_custom_call.1} parent=1 // pred_check_branch
      %78 = sbr.rel (0) target = $region45
    $region44: #{tpu_custom_call.1} parent=1 // pred_region
      %79 = dma.done [#allocation9], 1024
    $region45: #{tpu_custom_call.1} parent=1 // pred_fallthru
      _
    %v81 = vld [vmem:[#allocation2] sm:$0xf]
    %v82 = vld [vmem:[#allocation5] sm:$0xf]
    %v83 = vld [vmem:[#allocation5 + $0x4] sm:$0xf]
    %v84 = vld [vmem:[#allocation5 + $0x8] sm:$0xf]
    %v85 = vld [vmem:[#allocation5 + $0xc] sm:$0xf]
    %v86 = vld [vmem:[#allocation5 + $0x10] sm:$0xf]
    %v87 = vld [vmem:[#allocation5 + $0x14] sm:$0xf]
    %v88 = vld [vmem:[#allocation5 + $0x18] sm:$0xf]
    %v89 = vld [vmem:[#allocation5 + $0x1c] sm:$0xf]
    %v90 = vld [vmem:[#allocation5 + $0x20] sm:$0xf]
    %v91 = vld [vmem:[#allocation5 + $0x24] sm:$0xf]
    %v92 = vld [vmem:[#allocation5 + $0x28] sm:$0xf]
    %v93 = vld [vmem:[#allocation5 + $0x2c] sm:$0xf]
    %v94 = vld [vmem:[#allocation5 + $0x30] sm:$0xf]
    %v95 = vld [vmem:[#allocation5 + $0x34] sm:$0xf]
    %v96 = vld [vmem:[#allocation5 + $0x38] sm:$0xf]
    %v97 = vld [vmem:[#allocation5 + $0x3c] sm:$0xf]
    %v98 = vld [vmem:[%s2] sm:$0x1]
    %v100 = vlaneseq
    %v101 = vshrl.u32 %v100, 7
    %v102 = vsub.s32 0, %v101
    %v103 = vrot.slane %v98, %v102
    %v121 = vunpack.c.l.b16 %v82
    %v122 = vunpack.c.l.b16 %v83
    %v123 = vunpack.c.l.b16 %v84
    %v124 = vunpack.c.l.b16 %v85
    %v125 = vunpack.c.l.b16 %v86
    %v126 = vunpack.c.l.b16 %v87
    %v127 = vunpack.c.l.b16 %v88
    %v128 = vunpack.c.l.b16 %v89
    %v129 = vunpack.c.l.b16 %v90
    %v130 = vunpack.c.l.b16 %v91
    %v131 = vunpack.c.l.b16 %v92
    %v132 = vunpack.c.l.b16 %v93
    %v133 = vunpack.c.l.b16 %v94
    %v134 = vunpack.c.l.b16 %v95
    %v135 = vunpack.c.l.b16 %v96
    %v136 = vunpack.c.l.b16 %v97
    %v137 = vpack.c.b16 %v122, %v121
    %v138 = vpack.c.b16 %v124, %v123
    %v139 = vpack.c.b16 %v126, %v125
    %v140 = vpack.c.b16 %v128, %v127
    %v141 = vpack.c.b16 %v130, %v129
    %v142 = vpack.c.b16 %v132, %v131
    %v143 = vpack.c.b16 %v134, %v133
    %v144 = vpack.c.b16 %v136, %v135
    %153 = vmatprep.subr.bf16.mxu0 0
    %154 = vmatpush1.bf16.msra.mxu0 %v144
    %155 = vmatprep.subr.bf16.mxu0 0
    %156 = vmatpush1.bf16.msra.mxu0 %v143
    %157 = vmatprep.subr.bf16.mxu0 0
    %158 = vmatpush1.bf16.msra.mxu0 %v142
    %159 = vmatprep.subr.bf16.mxu0 0
    %160 = vmatpush1.bf16.msra.mxu0 %v141
    %161 = vmatprep.subr.bf16.mxu0 0
    %162 = vmatpush1.bf16.msra.mxu0 %v140
    %163 = vmatprep.subr.bf16.mxu0 0
    %164 = vmatpush1.bf16.msra.mxu0 %v139
    %165 = vmatprep.subr.bf16.mxu0 0
    %166 = vmatpush1.bf16.msra.mxu0 %v138
    %167 = vmatprep.subr.bf16.mxu0 0
    %168 = vmatpush1.bf16.msra.mxu0 %v137
    %169 = vmatprep.subr.bf16.mxu0 0
    %170 = vmatpush2.bf16.msra.mxu0 0
    %171 = vmatprep.subr.bf16.mxu0 0
    %172 = vmatpush2.bf16.msra.mxu0 0
    %173 = vmatprep.subr.bf16.mxu0 0
    %174 = vmatpush2.bf16.msra.mxu0 0
    %175 = vmatprep.subr.bf16.mxu0 0
    %176 = vmatpush2.bf16.msra.mxu0 0
    %177 = vmatprep.subr.bf16.mxu0 0
    %178 = vmatpush2.bf16.msra.mxu0 0
    %179 = vmatprep.subr.bf16.mxu0 0
    %180 = vmatpush2.bf16.msra.mxu0 0
    %181 = vmatprep.subr.bf16.mxu0 0
    %182 = vmatpush2.bf16.msra.mxu0 0
    %183 = vmatprep.subr.bf16.mxu0 0
    %184 = vmatpush2.bf16.msra.mxu0 0
    %185 = vmatprep.mubr.bf16.mxu0 0
    %186 = vmatmul.mubr.bf16.gmra.mxu0 %v81
    %v187 = vpop.f32.mrf.mxu0
    %v188 = vadd.f32 %v103, %v187
    %v189 = vpop.f32.mrf.mxu0
    %v190 = vpop.f32.mrf.mxu0
    %v191 = vpop.f32.mrf.mxu0
    %192 = vdwg.mxu0
    %v193 = vxor.u32 %v188, 2147483648
    %v194 = vmul.f32 %v193, 1.442695
    %v195 = vpow.pop %v194
    %v196 = vadd.f32 %v195, 1.0
    %v197 = vrcp.pop %v196
    %v198 = vmul.f32 1.0, %v197
    %v199 = vmul.f32 %v188, %v198
    %v200 = vpack.c.bf16 %v199, %v199
    %v201 = vld [vmem:[#allocation7] sm:$0xf]
    %v202 = vld [vmem:[#allocation7 + $0x4] sm:$0xf]
    %v203 = vld [vmem:[#allocation7 + $0x8] sm:$0xf]
    %v204 = vld [vmem:[#allocation7 + $0xc] sm:$0xf]
    %v205 = vld [vmem:[#allocation7 + $0x10] sm:$0xf]
    %v206 = vld [vmem:[#allocation7 + $0x14] sm:$0xf]
    %v207 = vld [vmem:[#allocation7 + $0x18] sm:$0xf]
    %v208 = vld [vmem:[#allocation7 + $0x1c] sm:$0xf]
    %v209 = vld [vmem:[#allocation7 + $0x20] sm:$0xf]
    %v210 = vld [vmem:[#allocation7 + $0x24] sm:$0xf]
    %v211 = vld [vmem:[#allocation7 + $0x28] sm:$0xf]
    %v212 = vld [vmem:[#allocation7 + $0x2c] sm:$0xf]
    %v213 = vld [vmem:[#allocation7 + $0x30] sm:$0xf]
    %v214 = vld [vmem:[#allocation7 + $0x34] sm:$0xf]
    %v215 = vld [vmem:[#allocation7 + $0x38] sm:$0xf]
    %v216 = vld [vmem:[#allocation7 + $0x3c] sm:$0xf]
    %v217 = vld [vmem:[%s4] sm:$0x1]
    %v219 = vlaneseq
    %v220 = vshrl.u32 %v219, 7
    %v221 = vsub.s32 0, %v220
    %v222 = vrot.slane %v217, %v221
    %v240 = vunpack.c.l.b16 %v201
    %v241 = vunpack.c.l.b16 %v202
    %v242 = vunpack.c.l.b16 %v203
    %v243 = vunpack.c.l.b16 %v204
    %v244 = vunpack.c.l.b16 %v205
    %v245 = vunpack.c.l.b16 %v206
    %v246 = vunpack.c.l.b16 %v207
    %v247 = vunpack.c.l.b16 %v208
    %v248 = vunpack.c.l.b16 %v209
    %v249 = vunpack.c.l.b16 %v210
    %v250 = vunpack.c.l.b16 %v211
    %v251 = vunpack.c.l.b16 %v212
    %v252 = vunpack.c.l.b16 %v213
    %v253 = vunpack.c.l.b16 %v214
    %v254 = vunpack.c.l.b16 %v215
    %v255 = vunpack.c.l.b16 %v216
    %v256 = vpack.c.b16 %v241, %v240
    %v257 = vpack.c.b16 %v243, %v242
    %v258 = vpack.c.b16 %v245, %v244
    %v259 = vpack.c.b16 %v247, %v246
    %v260 = vpack.c.b16 %v249, %v248
    %v261 = vpack.c.b16 %v251, %v250
    %v262 = vpack.c.b16 %v253, %v252
    %v263 = vpack.c.b16 %v255, %v254
    %272 = vmatprep.subr.bf16.mxu0 0
    %273 = vmatpush1.bf16.msra.mxu0 %v263
    %274 = vmatprep.subr.bf16.mxu0 0
    %275 = vmatpush1.bf16.msra.mxu0 %v262
    %276 = vmatprep.subr.bf16.mxu0 0
    %277 = vmatpush1.bf16.msra.mxu0 %v261
    %278 = vmatprep.subr.bf16.mxu0 0
    %279 = vmatpush1.bf16.msra.mxu0 %v260
    %280 = vmatprep.subr.bf16.mxu0 0
    %281 = vmatpush1.bf16.msra.mxu0 %v259
    %282 = vmatprep.subr.bf16.mxu0 0
    %283 = vmatpush1.bf16.msra.mxu0 %v258
    %284 = vmatprep.subr.bf16.mxu0 0
    %285 = vmatpush1.bf16.msra.mxu0 %v257
    %286 = vmatprep.subr.bf16.mxu0 0
    %287 = vmatpush1.bf16.msra.mxu0 %v256
    %288 = vmatprep.subr.bf16.mxu0 0
    %289 = vmatpush2.bf16.msra.mxu0 0
    %290 = vmatprep.subr.bf16.mxu0 0
    %291 = vmatpush2.bf16.msra.mxu0 0
    %292 = vmatprep.subr.bf16.mxu0 0
    %293 = vmatpush2.bf16.msra.mxu0 0
    %294 = vmatprep.subr.bf16.mxu0 0
    %295 = vmatpush2.bf16.msra.mxu0 0
    %296 = vmatprep.subr.bf16.mxu0 0
    %297 = vmatpush2.bf16.msra.mxu0 0
    %298 = vmatprep.subr.bf16.mxu0 0
    %299 = vmatpush2.bf16.msra.mxu0 0
    %300 = vmatprep.subr.bf16.mxu0 0
    %301 = vmatpush2.bf16.msra.mxu0 0
    %302 = vmatprep.subr.bf16.mxu0 0
    %303 = vmatpush2.bf16.msra.mxu0 0
    %304 = vmatprep.mubr.bf16.mxu0 0
    %305 = vmatmul.mubr.bf16.gmra.mxu0 %v200
    %v306 = vpop.f32.mrf.mxu0
    %v307 = vadd.f32 %v222, %v306
    %v308 = vpop.f32.mrf.mxu0
    %v309 = vpop.f32.mrf.mxu0
    %v310 = vpop.f32.mrf.mxu0
    %311 = vdwg.mxu0
    %v312 = vxor.u32 %v307, 2147483648
    %v313 = vmul.f32 %v312, 1.442695
    %v314 = vpow.pop %v313
    %v315 = vadd.f32 %v314, 1.0
    %v316 = vrcp.pop %v315
    %v317 = vmul.f32 1.0, %v316
    %v318 = vmul.f32 %v307, %v317
    %v319 = vpack.c.bf16 %v318, %v318
    %v320 = vld [vmem:[#allocation8] sm:$0xf]
    %v321 = vld [vmem:[#allocation8 + $0x4] sm:$0xf]
    %v322 = vld [vmem:[#allocation8 + $0x8] sm:$0xf]
    %v323 = vld [vmem:[#allocation8 + $0xc] sm:$0xf]
    %v324 = vld [vmem:[#allocation8 + $0x10] sm:$0xf]
    %v325 = vld [vmem:[#allocation8 + $0x14] sm:$0xf]
    %v326 = vld [vmem:[#allocation8 + $0x18] sm:$0xf]
    %v327 = vld [vmem:[#allocation8 + $0x1c] sm:$0xf]
    %v328 = vld [vmem:[#allocation8 + $0x20] sm:$0xf]
    %v329 = vld [vmem:[#allocation8 + $0x24] sm:$0xf]
    %v330 = vld [vmem:[#allocation8 + $0x28] sm:$0xf]
    %v331 = vld [vmem:[#allocation8 + $0x2c] sm:$0xf]
    %v332 = vld [vmem:[#allocation8 + $0x30] sm:$0xf]
    %v333 = vld [vmem:[#allocation8 + $0x34] sm:$0xf]
    %v334 = vld [vmem:[#allocation8 + $0x38] sm:$0xf]
    %v335 = vld [vmem:[#allocation8 + $0x3c] sm:$0xf]
    %v336 = vld [vmem:[%s6] sm:$0x1]
    %v338 = vlaneseq
    %v339 = vshrl.u32 %v338, 7
    %v340 = vsub.s32 0, %v339
    %v341 = vrot.slane %v336, %v340
    %v359 = vunpack.c.l.b16 %v320
    %v360 = vunpack.c.l.b16 %v321
    %v361 = vunpack.c.l.b16 %v322
    %v362 = vunpack.c.l.b16 %v323
    %v363 = vunpack.c.l.b16 %v324
    %v364 = vunpack.c.l.b16 %v325
    %v365 = vunpack.c.l.b16 %v326
    %v366 = vunpack.c.l.b16 %v327
    %v367 = vunpack.c.l.b16 %v328
    %v368 = vunpack.c.l.b16 %v329
    %v369 = vunpack.c.l.b16 %v330
    %v370 = vunpack.c.l.b16 %v331
    %v371 = vunpack.c.l.b16 %v332
    %v372 = vunpack.c.l.b16 %v333
    %v373 = vunpack.c.l.b16 %v334
    %v374 = vunpack.c.l.b16 %v335
    %v375 = vpack.c.b16 %v360, %v359
    %v376 = vpack.c.b16 %v362, %v361
    %v377 = vpack.c.b16 %v364, %v363
    %v378 = vpack.c.b16 %v366, %v365
    %v379 = vpack.c.b16 %v368, %v367
    %v380 = vpack.c.b16 %v370, %v369
    %v381 = vpack.c.b16 %v372, %v371
    %v382 = vpack.c.b16 %v374, %v373
    %391 = vmatprep.subr.bf16.mxu0 0
    %392 = vmatpush1.bf16.msra.mxu0 %v382
    %393 = vmatprep.subr.bf16.mxu0 0
    %394 = vmatpush1.bf16.msra.mxu0 %v381
    %395 = vmatprep.subr.bf16.mxu0 0
    %396 = vmatpush1.bf16.msra.mxu0 %v380
    %397 = vmatprep.subr.bf16.mxu0 0
    %398 = vmatpush1.bf16.msra.mxu0 %v379
    %399 = vmatprep.subr.bf16.mxu0 0
    %400 = vmatpush1.bf16.msra.mxu0 %v378
    %401 = vmatprep.subr.bf16.mxu0 0
    %402 = vmatpush1.bf16.msra.mxu0 %v377
    %403 = vmatprep.subr.bf16.mxu0 0
    %404 = vmatpush1.bf16.msra.mxu0 %v376
    %405 = vmatprep.subr.bf16.mxu0 0
    %406 = vmatpush1.bf16.msra.mxu0 %v375
    %407 = vmatprep.subr.bf16.mxu0 0
    %408 = vmatpush2.bf16.msra.mxu0 0
    %409 = vmatprep.subr.bf16.mxu0 0
    %410 = vmatpush2.bf16.msra.mxu0 0
    %411 = vmatprep.subr.bf16.mxu0 0
    %412 = vmatpush2.bf16.msra.mxu0 0
    %413 = vmatprep.subr.bf16.mxu0 0
    %414 = vmatpush2.bf16.msra.mxu0 0
    %415 = vmatprep.subr.bf16.mxu0 0
    %416 = vmatpush2.bf16.msra.mxu0 0
    %417 = vmatprep.subr.bf16.mxu0 0
    %418 = vmatpush2.bf16.msra.mxu0 0
    %419 = vmatprep.subr.bf16.mxu0 0
    %420 = vmatpush2.bf16.msra.mxu0 0
    %421 = vmatprep.subr.bf16.mxu0 0
    %422 = vmatpush2.bf16.msra.mxu0 0
    %423 = vmatprep.mubr.bf16.mxu0 0
    %424 = vmatmul.mubr.bf16.gmra.mxu0 %v319
    %v425 = vpop.f32.mrf.mxu0
    %v426 = vadd.f32 %v341, %v425
    %v427 = vpop.f32.mrf.mxu0
    %v428 = vpop.f32.mrf.mxu0
    %v429 = vpop.f32.mrf.mxu0
    %430 = vdwg.mxu0
    %431 = vst [vmem:[#allocation10] sm:$0xff] %v426
    // Predicated region
    $region46: #{tpu_custom_call.1} parent=1 // pred_check
      _
    $region47: #{tpu_custom_call.1} parent=1 // pred_check_branch
      %433 = sbr.rel (0) target = $region49
    $region48: #{tpu_custom_call.1} parent=1 // pred_region
      %s435 = ssub.s32 128, 128
      %436 = vsyncadd [#allocation4], %s435
      %s438 = sshll.u32 [#allocation10], 4
      %s439 = int_to_ptr.vmem [resolvable:$true] %s438
      %441 = dma.vmem_to_hbm [thread:$0]  %s439, 128, %s7, [#allocation4]
    $region49: #{tpu_custom_call.1} parent=1 // pred_fallthru
      _
    // Predicated region
    $region50: #{tpu_custom_call.1} parent=1 // pred_check
      _
    $region51: #{tpu_custom_call.1} parent=1 // pred_check_branch
      %443 = sbr.rel (0) target = $region53
    $region52: #{tpu_custom_call.1} parent=1 // pred_region
      %444 = dma.done [#allocation4], 128
    $region53: #{tpu_custom_call.1} parent=1 // pred_fallthru
      _
    %445 = vsyncpa [#allocation3], 1
    %446 = vsyncpa [#allocation6], 1
    %447 = vsyncpa [#allocation9], 1
    %448 = vsyncpa [#allocation4], 1

</llo_original>
